<compile_context>
chip_gen: v6e
topology: v6e:2x2x1
jax: 0.10.0
libtpu: 0.0.40
codegen_flags: <defaults>
</compile_context>

<pallas_src>
import functools

import jax
import jax.numpy as jnp
from jax.experimental import pallas as pl
from jax.experimental.pallas import tpu as pltpu


_LANES = 128


def _round_up(x, m):
    return ((x + m - 1) // m) * m


# ----------------------------------------------------------------------------
# Fused Pallas kernel: one grid step == one decoder layer.
# ----------------------------------------------------------------------------
def _det3d_loss_kernel(n_ref, logits_ref, hot_ref, src_ref, tgt_ref, out_ref,
                       *, alpha, gamma):
    """Per-layer loss sums.

    n_ref      : (L,) int32 SMEM — number of valid matched pairs per layer.
    logits_ref : (1, BQ, C)  ALL classification logits of this layer.
    hot_ref    : (1, 1, NP)  logits at matched (b, q, target-class) positions
                 (zero padded to NP, masked with n_ref).
    src_ref    : (1, 8, NP)  matched predicted boxes, component-major
                 rows = (cx, cy, cz, l, w, h, rad, pad), columns on lane axis.
    tgt_ref    : (1, 8, NP)  matched target boxes, same layout.
    out_ref    : (1, 1, 128) f32 — lanes 0..3 = [ce, bbox, giou, rad] sums.
    """
    layer = pl.program_id(0)
    n_hot = n_ref[layer]

    # ---------------- classification: sigmoid focal loss, summed ------------
    # total = sum_all focal(x, t=0) + sum_matched [focal(x,1) - focal(x,0)]
    x = logits_ref[0].astype(jnp.float32)                     # (BQ, C)
    e = jnp.exp(-jnp.abs(x))
    sp = jnp.log(1.0 + e)
    bce_neg = jnp.maximum(x, 0.0) + sp                        # BCE(x, t=0)
    p = jnp.where(x >= 0.0, 1.0, e) * pl.reciprocal(1.0 + e, approx=True)
    mod0 = p * p if gamma == 2.0 else p ** gamma
    ce_sum = jnp.sum((1.0 - alpha) * mod0 * bce_neg)

    xh = hot_ref[0].astype(jnp.float32)                       # (1, NP)
    eh = jnp.exp(-jnp.abs(xh))
    sph = jnp.log(1.0 + eh)
    bce0h = jnp.maximum(xh, 0.0) + sph                        # BCE(xh, t=0)
    bce1h = jnp.maximum(-xh, 0.0) + sph                       # BCE(xh, t=1)
    ph = jnp.where(xh >= 0.0, 1.0, eh) * pl.reciprocal(1.0 + eh, approx=True)
    if gamma == 2.0:
        mod1h = (1.0 - ph) * (1.0 - ph)
        mod0h = ph * ph
    else:
        mod1h = (1.0 - ph) ** gamma
        mod0h = ph ** gamma
    corr = alpha * mod1h * bce1h - (1.0 - alpha) * mod0h * bce0h
    lane = jax.lax.broadcasted_iota(jnp.int32, xh.shape, 1)   # (1, NP)
    validf = (lane < n_hot).astype(jnp.float32)
    ce_sum = ce_sum + jnp.sum(corr * validf)

    # ---------------- regression: L1 (bbox / rad) + 1 - GIoU3D --------------
    eps = jnp.float32(1e-10)
    src = src_ref[0].astype(jnp.float32)                      # (8, NP)
    tgt = tgt_ref[0].astype(jnp.float32)
    l1 = jnp.abs(src - tgt)
    bbox_sum = jnp.sum(l1[0:6, :] * validf)
    rad_sum = jnp.sum(l1[6:7, :] * validf)

    # box_cxcyczlwh_to_xyxyxy
    s_min = src[0:3, :] - 0.5 * src[3:6, :]
    s_max = src[0:3, :] + 0.5 * src[3:6, :]
    t_min = tgt[0:3, :] - 0.5 * tgt[3:6, :]
    t_max = tgt[0:3, :] + 0.5 * tgt[3:6, :]

    def _vol(lo, hi):
        ext = jnp.maximum(hi - lo, 0.0)
        return ext[0:1, :] * ext[1:2, :] * ext[2:3, :]        # (1, NP)

    vol_s = _vol(s_min, s_max)
    vol_t = _vol(t_min, t_max)
    inter = _vol(jnp.maximum(s_min, t_min), jnp.minimum(s_max, t_max))
    union = vol_s + vol_t - inter
    iou = inter / jnp.maximum(union, eps)
    vol_e = _vol(jnp.minimum(s_min, t_min), jnp.maximum(s_max, t_max))
    giou = iou - (vol_e - union) / jnp.maximum(vol_e, eps)
    giou_sum = jnp.sum((1.0 - giou) * validf)

    # ---------------- merged lane-dense output row ---------------------------
    out_lane = jax.lax.broadcasted_iota(jnp.int32, out_ref.shape, 2)
    out_ref[...] = jnp.where(
        out_lane == 0, ce_sum,
        jnp.where(out_lane == 1, bbox_sum,
                  jnp.where(out_lane == 2, giou_sum,
                            jnp.where(out_lane == 3, rad_sum, 0.0))))


def fused_det3d_loss_sums(logits, hot, src_boxes, tgt_boxes, n_matched,
                          focal_alpha=0.25, gamma=2.0):
    """One pallas_call for every decoder layer at once.

    logits    : (L, B*Q, C)   raw classification logits (native dtype).
    hot       : (L, 1, NP)    matched-position logits, zero padded.
    src_boxes : (L, 8, NP)    matched predicted boxes, component-major, padded.
    tgt_boxes : (L, 8, NP)    matched target boxes, component-major, padded.
    n_matched : (L,) int32    number of valid matched pairs per layer.
    Returns (L, 4) f32 sums: [ce, bbox, giou, rad] per layer.
    """
    L, BQ, C = logits.shape
    NP = int(hot.shape[-1])

    grid_spec = pltpu.PrefetchScalarGridSpec(
        num_scalar_prefetch=1,
        grid=(L,),
        in_specs=[
            pl.BlockSpec((1, BQ, C), lambda l, n: (l, 0, 0)),
            pl.BlockSpec((1, 1, NP), lambda l, n: (l, 0, 0)),
            pl.BlockSpec((1, 8, NP), lambda l, n: (l, 0, 0)),
            pl.BlockSpec((1, 8, NP), lambda l, n: (l, 0, 0)),
        ],
        out_specs=pl.BlockSpec((1, 1, _LANES), lambda l, n: (l, 0, 0)),
    )
    out = pl.pallas_call(
        functools.partial(_det3d_loss_kernel, alpha=float(focal_alpha),
                          gamma=float(gamma)),
        grid_spec=grid_spec,
        out_shape=jax.ShapeDtypeStruct((L, 1, _LANES), jnp.float32),
        compiler_params=pltpu.CompilerParams(
            dimension_semantics=("parallel",)),
    )(n_matched, logits, hot, src_boxes, tgt_boxes)
    return out.reshape(L, _LANES)[:, :4]


# ----------------------------------------------------------------------------
# Module-equivalent glue (mirrors the PyTorch classes)
# ----------------------------------------------------------------------------
def _get_src_permutation_idx(indices):
    batch_idx = jnp.concatenate(
        [jnp.full_like(src, i) for i, (src, _) in enumerate(indices)])
    src_idx = jnp.concatenate([src for src, _ in indices])
    return batch_idx, src_idx


class ClassificationLoss:
    """Holds focal_alpha and the final-layer (src_logits, target_classes)."""

    def __init__(self, focal_alpha):
        self.focal_alpha = focal_alpha
        self.target_classes = None
        self.src_logits = None


class RegressionLoss:
    pass


class Det3DLoss:
    def __init__(self, matcher, weight_dict, losses):
        self.matcher = matcher
        self.weight_dict = weight_dict
        self.losses = losses
        self.det3d_losses = {}
        self.det3d_enc_losses = {}
        self.focal_alpha = 0.25
        for loss in losses:
            if loss == 'boxes':
                self.det3d_losses[loss] = RegressionLoss()
                self.det3d_enc_losses[loss + '_enc'] = RegressionLoss()
            elif loss == 'focal_labels':
                self.det3d_losses[loss] = ClassificationLoss(0.25)
                self.det3d_enc_losses[loss + '_enc'] = ClassificationLoss(0.25)
            else:
                raise ValueError(
                    f'Only boxes|focal_labels are supported. Found {loss}')

    def get_target_classes(self):
        for k in self.det3d_losses:
            if 'labels' in k:
                return (self.det3d_losses[k].src_logits,
                        self.det3d_losses[k].target_classes)

    def _gather_layer(self, layer_outputs, targets, indices):
        assert 'pred_logits' in layer_outputs
        assert 'pred_boxes' in layer_outputs
        # TODO(synk): the 'topk_indexes' gather branch of the reference is not
        # exercised here (outputs never carry 'topk_indexes' in this setup).
        batch_idx, src_idx = _get_src_permutation_idx(indices)
        target_classes_o = jnp.concatenate(
            [t['labels'][J] for t, (_, J) in zip(targets, indices)])
        src_logits = layer_outputs['pred_logits']                 # (B, Q, C)
        matched_logits = src_logits[batch_idx, src_idx]           # (N, C)
        n = matched_logits.shape[0]
        # NOTE: labels must be < C (same contract as the PyTorch reference,
        # which would index-error otherwise).
        hot_logits = matched_logits[jnp.arange(n), target_classes_o]  # (N,)
        src_boxes = layer_outputs['pred_boxes'][batch_idx, src_idx]   # (N, 7)
        tgt_boxes = jnp.concatenate(
            [t['gt_boxes'][i] for t, (_, i) in zip(targets, indices)], axis=0)
        return (src_logits, hot_logits, src_boxes, tgt_boxes,
                matched_logits, target_classes_o)

    def __call__(self, outputs, targets):
        # TODO(synk): torch.distributed.all_reduce of num_boxes skipped
        # (single-host / world_size == 1 semantics).
        num_boxes = sum(int(t['labels'].shape[0]) for t in targets)
        num_boxes = max(float(num_boxes), 1.0)

        # Collect every decoder layer (aux + final) so a SINGLE fused kernel
        # launch computes all losses for all layers.
        layer_outputs, key_suffixes = [], []
        if 'aux_outputs' in outputs:
            for i, aux in enumerate(outputs['aux_outputs']):
                layer_outputs.append(aux)
                key_suffixes.append(f'_{i}')
        layer_outputs.append(outputs)
        key_suffixes.append('')

        logits_l, hot_l, srcb_l, tgtb_l, n_l = [], [], [], [], []
        final_matched_logits = None
        final_target_classes = None
        for lo in layer_outputs:
            indices = self.matcher(lo, targets)
            (full_logits, hot, srcb, tgtb, matched_logits,
             tgt_classes) = self._gather_layer(lo, targets, indices)
            logits_l.append(full_logits.reshape(-1, full_logits.shape[-1]))
            hot_l.append(hot)
            srcb_l.append(srcb)
            tgtb_l.append(tgtb)
            n_l.append(int(hot.shape[0]))
            final_matched_logits = matched_logits
            final_target_classes = tgt_classes

        if 'focal_labels' in self.det3d_losses:
            self.det3d_losses['focal_labels'].src_logits = final_matched_logits
            self.det3d_losses['focal_labels'].target_classes = final_target_classes

        # Static lane padding for matched pairs; actual counts go to SMEM.
        NP = max(_round_up(max(max(n_l), 1), _LANES), _LANES)

        def _pad_hot(h):
            return jnp.pad(h, (0, NP - h.shape[0])).reshape(1, NP)

        def _pad_boxes(b):
            bt = jnp.transpose(b)                               # (7, N)
            return jnp.pad(bt, ((0, 1), (0, NP - bt.shape[1]))) # (8, NP)

        # TODO(synk): for encoder-sized matched counts, repack boxes as
        # (NP/128, 128) per-component planes for full-vreg GIoU math.
        logits = jnp.stack(logits_l)                            # (L, B*Q, C)
        hot = jnp.stack([_pad_hot(h) for h in hot_l])           # (L, 1, NP)
        srcb = jnp.stack([_pad_boxes(b) for b in srcb_l])       # (L, 8, NP)
        tgtb = jnp.stack([_pad_boxes(b) for b in tgtb_l])       # (L, 8, NP)
        n_matched = jnp.asarray(n_l, dtype=jnp.int32)           # (L,)

        focal_alpha = self.focal_alpha
        if 'focal_labels' in self.det3d_losses:
            focal_alpha = self.det3d_losses['focal_labels'].focal_alpha

        sums = fused_det3d_loss_sums(logits, hot, srcb, tgtb, n_matched,
                                     focal_alpha=focal_alpha, gamma=2.0)

        losses = {}
        for li, suffix in enumerate(key_suffixes):
            if 'focal_labels' in self.losses:
                losses['loss_ce' + suffix] = sums[li, 0] / num_boxes
            if 'boxes' in self.losses:
                losses['loss_bbox' + suffix] = sums[li, 1] / num_boxes
                losses['loss_giou' + suffix] = sums[li, 2] / num_boxes
                losses['loss_rad' + suffix] = sums[li, 3] / num_boxes
        return losses


def identity_matcher(outputs, targets):
    # TODO(synk): the real module uses an external Hungarian matcher; a
    # deterministic identity assignment (src j <-> gt j) is used here.
    return [(jnp.arange(t['labels'].shape[0], dtype=jnp.int32),
             jnp.arange(t['labels'].shape[0], dtype=jnp.int32))
            for t in targets]


# ----------------------------------------------------------------------------
# Example run
# ----------------------------------------------------------------------------
if __name__ == "__main__":
    key = jax.random.PRNGKey(0)
    B, Q, C, N = 2, 8, 3, 3     # batch, queries, classes, gt boxes per sample
    NUM_AUX = 2                 # aux decoder layers (exercises the layer grid)

    def make_preds(k):
        k1, k2, k3, k4 = jax.random.split(k, 4)
        pred_logits = jax.random.normal(k1, (B, Q, C), jnp.float32)
        centers = jax.random.normal(k2, (B, Q, 3), jnp.float32)
        sizes = jax.random.uniform(k3, (B, Q, 3), jnp.float32, 0.5, 2.0)
        rads = jax.random.normal(k4, (B, Q, 1), jnp.float32) * 0.1
        pred_boxes = jnp.concatenate([centers, sizes, rads], axis=-1)
        return pred_logits, pred_boxes

    keys = jax.random.split(key, 2 + NUM_AUX)
    k_main, k_tgt = keys[0], keys[1]
    pred_logits, pred_boxes = make_preds(k_main)
    aux_outputs = []
    for ai in range(NUM_AUX):
        al, ab = make_preds(keys[2 + ai])
        aux_outputs.append({'pred_logits': al, 'pred_boxes': ab})

    targets = []
    for b in range(B):
        kk = jax.random.fold_in(k_tgt, b)
        ka, kb, kc, kd = jax.random.split(kk, 4)
        gt_centers = jax.random.normal(ka, (N, 3), jnp.float32)
        gt_sizes = jax.random.uniform(kb, (N, 3), jnp.float32, 0.5, 2.0)
        gt_rads = jax.random.normal(kc, (N, 1), jnp.float32) * 0.1
        gt_boxes = jnp.concatenate([gt_centers, gt_sizes, gt_rads], axis=-1)
        labels = jax.random.randint(kd, (N,), 0, C, dtype=jnp.int32)
        targets.append({'gt_boxes': gt_boxes, 'labels': labels})

    outputs = {'pred_logits': pred_logits, 'pred_boxes': pred_boxes,
               'aux_outputs': aux_outputs}
    weight_dict = {'loss_ce': 1.0, 'loss_bbox': 4.0,
                   'loss_giou': 2.0, 'loss_rad': 4.0}
    criterion = Det3DLoss(identity_matcher, weight_dict,
                          ['focal_labels', 'boxes'])

    losses = criterion(outputs, targets)
    losses = {k: jax.block_until_ready(v) for k, v in losses.items()}
    print("KERNEL_OK")
</pallas_src>

<mosaic_0001>
module attributes {stable_mosaic.version = 11 : i64} {
  func.func @_det3d_loss_kernel(%arg0: i32, %arg1: memref<3xi32, #tpu.memory_space<smem>>, %arg2: memref<1x16x3xf32, #tpu.memory_space<vmem>>, %arg3: memref<1x1x128xf32, #tpu.memory_space<vmem>>, %arg4: memref<1x8x128xf32, #tpu.memory_space<vmem>>, %arg5: memref<1x8x128xf32, #tpu.memory_space<vmem>>, %arg6: memref<1x1x128xf32, #tpu.memory_space<vmem>>) attributes {dimension_semantics = [#tpu.dimension_semantics<parallel>], iteration_bounds = array<i64: 3>, scalar_prefetch = 1 : i64, scratch_operands = 0 : i64, tpu.core_type = #tpu.core_type<tc>, window_params = [{transform_indices = @transform_0, window_bounds = array<i64: 1, 16, 3>}, {transform_indices = @transform_1, window_bounds = array<i64: 1, 1, 128>}, {transform_indices = @transform_2, window_bounds = array<i64: 1, 8, 128>}, {transform_indices = @transform_3, window_bounds = array<i64: 1, 8, 128>}, {transform_indices = @transform_4, window_bounds = array<i64: 1, 1, 128>}]} {
    %0 = arith.index_cast %arg0 : i32 to index
    %1 = memref.load %arg1[%0] : memref<3xi32, #tpu.memory_space<smem>>
    %c0 = arith.constant 0 : index
    %c0_0 = arith.constant 0 : index
    %c0_1 = arith.constant 0 : index
    %2 = vector.load %arg2[%c0, %c0_0, %c0_1] : memref<1x16x3xf32, #tpu.memory_space<vmem>>, vector<1x16x3xf32>
    %3 = vector.shape_cast %2 : vector<1x16x3xf32> to vector<16x3xf32>
    %4 = math.absf %3 : vector<16x3xf32>
    %cst = arith.constant 0.000000e+00 : f32
    %5 = vector.broadcast %cst : f32 to vector<16x3xf32>
    %6 = arith.subf %5, %4 : vector<16x3xf32>
    %7 = math.exp %6 : vector<16x3xf32>
    %cst_2 = arith.constant 1.000000e+00 : f32
    %8 = vector.broadcast %cst_2 : f32 to vector<16x3xf32>
    %9 = arith.addf %8, %7 : vector<16x3xf32>
    %10 = math.log %9 : vector<16x3xf32>
    %cst_3 = arith.constant 0.000000e+00 : f32
    %11 = vector.broadcast %cst_3 : f32 to vector<16x3xf32>
    %12 = arith.maximumf %3, %11 : vector<16x3xf32>
    %13 = arith.addf %12, %10 : vector<16x3xf32>
    %cst_4 = arith.constant 0.000000e+00 : f32
    %14 = vector.broadcast %cst_4 : f32 to vector<16x3xf32>
    %15 = arith.cmpf oge, %3, %14 : vector<16x3xf32>
    %cst_5 = arith.constant 1.000000e+00 : f32
    %16 = vector.broadcast %cst_5 : f32 to vector<16x3xf32>
    %17 = arith.select %15, %16, %7 : vector<16x3xi1>, vector<16x3xf32>
    %cst_6 = arith.constant 1.000000e+00 : f32
    %18 = vector.broadcast %cst_6 : f32 to vector<16x3xf32>
    %19 = arith.addf %18, %7 : vector<16x3xf32>
    %20 = tpu.reciprocal %19 {approx = true} : vector<16x3xf32> -> vector<16x3xf32>
    %21 = arith.mulf %17, %20 : vector<16x3xf32>
    %22 = arith.mulf %21, %21 : vector<16x3xf32>
    %cst_7 = arith.constant 7.500000e-01 : f32
    %23 = vector.broadcast %cst_7 : f32 to vector<16x3xf32>
    %24 = arith.mulf %23, %22 : vector<16x3xf32>
    %25 = arith.mulf %24, %13 : vector<16x3xf32>
    %26 = vector.shape_cast %25 : vector<16x3xf32> to vector<1x16x3xf32>
    %cst_8 = arith.constant dense<0.000000e+00> : vector<1xf32>
    %27 = vector.multi_reduction <add>, %26, %cst_8 [1, 2] : vector<1x16x3xf32> to vector<1xf32>
    %28 = vector.shape_cast %27 : vector<1xf32> to vector<1x1x1xf32>
    %29 = vector.extract %28[0, 0, 0] : f32 from vector<1x1x1xf32>
    %c0_9 = arith.constant 0 : index
    %c0_10 = arith.constant 0 : index
    %c0_11 = arith.constant 0 : index
    %30 = vector.load %arg3[%c0_9, %c0_10, %c0_11] : memref<1x1x128xf32, #tpu.memory_space<vmem>>, vector<1x1x128xf32>
    %31 = vector.shape_cast %30 : vector<1x1x128xf32> to vector<1x128xf32>
    %32 = math.absf %31 : vector<1x128xf32>
    %cst_12 = arith.constant 0.000000e+00 : f32
    %33 = vector.broadcast %cst_12 : f32 to vector<1x128xf32>
    %34 = arith.subf %33, %32 : vector<1x128xf32>
    %35 = math.exp %34 : vector<1x128xf32>
    %cst_13 = arith.constant 1.000000e+00 : f32
    %36 = vector.broadcast %cst_13 : f32 to vector<1x128xf32>
    %37 = arith.addf %36, %35 : vector<1x128xf32>
    %38 = math.log %37 : vector<1x128xf32>
    %cst_14 = arith.constant 0.000000e+00 : f32
    %39 = vector.broadcast %cst_14 : f32 to vector<1x128xf32>
    %40 = arith.maximumf %31, %39 : vector<1x128xf32>
    %41 = arith.addf %40, %38 : vector<1x128xf32>
    %cst_15 = arith.constant 0.000000e+00 : f32
    %42 = vector.broadcast %cst_15 : f32 to vector<1x128xf32>
    %43 = arith.subf %42, %31 : vector<1x128xf32>
    %cst_16 = arith.constant 0.000000e+00 : f32
    %44 = vector.broadcast %cst_16 : f32 to vector<1x128xf32>
    %45 = arith.maximumf %43, %44 : vector<1x128xf32>
    %46 = arith.addf %45, %38 : vector<1x128xf32>
    %cst_17 = arith.constant 0.000000e+00 : f32
    %47 = vector.broadcast %cst_17 : f32 to vector<1x128xf32>
    %48 = arith.cmpf oge, %31, %47 : vector<1x128xf32>
    %cst_18 = arith.constant 1.000000e+00 : f32
    %49 = vector.broadcast %cst_18 : f32 to vector<1x128xf32>
    %50 = arith.select %48, %49, %35 : vector<1x128xi1>, vector<1x128xf32>
    %cst_19 = arith.constant 1.000000e+00 : f32
    %51 = vector.broadcast %cst_19 : f32 to vector<1x128xf32>
    %52 = arith.addf %51, %35 : vector<1x128xf32>
    %53 = tpu.reciprocal %52 {approx = true} : vector<1x128xf32> -> vector<1x128xf32>
    %54 = arith.mulf %50, %53 : vector<1x128xf32>
    %cst_20 = arith.constant 1.000000e+00 : f32
    %55 = vector.broadcast %cst_20 : f32 to vector<1x128xf32>
    %56 = arith.subf %55, %54 : vector<1x128xf32>
    %cst_21 = arith.constant 1.000000e+00 : f32
    %57 = vector.broadcast %cst_21 : f32 to vector<1x128xf32>
    %58 = arith.subf %57, %54 : vector<1x128xf32>
    %59 = arith.mulf %56, %58 : vector<1x128xf32>
    %60 = arith.mulf %54, %54 : vector<1x128xf32>
    %cst_22 = arith.constant 2.500000e-01 : f32
    %61 = vector.broadcast %cst_22 : f32 to vector<1x128xf32>
    %62 = arith.mulf %61, %59 : vector<1x128xf32>
    %63 = arith.mulf %62, %46 : vector<1x128xf32>
    %cst_23 = arith.constant 7.500000e-01 : f32
    %64 = vector.broadcast %cst_23 : f32 to vector<1x128xf32>
    %65 = arith.mulf %64, %60 : vector<1x128xf32>
    %66 = arith.mulf %65, %41 : vector<1x128xf32>
    %67 = arith.subf %63, %66 : vector<1x128xf32>
    %68 = tpu.iota {dimensions = array<i32: 1>} : vector<1x128xi32>
    %69 = vector.broadcast %1 : i32 to vector<1x128xi32>
    %70 = arith.cmpi slt, %68, %69 : vector<1x128xi32>
    %71 = arith.extui %70 : vector<1x128xi1> to vector<1x128xi32>
    %72 = arith.sitofp %71 : vector<1x128xi32> to vector<1x128xf32>
    %73 = arith.mulf %67, %72 : vector<1x128xf32>
    %74 = vector.shape_cast %73 : vector<1x128xf32> to vector<1x1x128xf32>
    %cst_24 = arith.constant dense<0.000000e+00> : vector<1xf32>
    %75 = vector.multi_reduction <add>, %74, %cst_24 [1, 2] : vector<1x1x128xf32> to vector<1xf32>
    %76 = vector.shape_cast %75 : vector<1xf32> to vector<1x1x1xf32>
    %77 = vector.extract %76[0, 0, 0] : f32 from vector<1x1x1xf32>
    %78 = arith.addf %29, %77 : f32
    %c0_25 = arith.constant 0 : index
    %c0_26 = arith.constant 0 : index
    %c0_27 = arith.constant 0 : index
    %79 = vector.load %arg4[%c0_25, %c0_26, %c0_27] : memref<1x8x128xf32, #tpu.memory_space<vmem>>, vector<1x8x128xf32>
    %80 = vector.shape_cast %79 : vector<1x8x128xf32> to vector<8x128xf32>
    %c0_28 = arith.constant 0 : index
    %c0_29 = arith.constant 0 : index
    %c0_30 = arith.constant 0 : index
    %81 = vector.load %arg5[%c0_28, %c0_29, %c0_30] : memref<1x8x128xf32, #tpu.memory_space<vmem>>, vector<1x8x128xf32>
    %82 = vector.shape_cast %81 : vector<1x8x128xf32> to vector<8x128xf32>
    %83 = arith.subf %80, %82 : vector<8x128xf32>
    %84 = math.absf %83 : vector<8x128xf32>
    %85 = vector.extract_strided_slice %84 {offsets = [0, 0], sizes = [6, 128], strides = [1, 1]} : vector<8x128xf32> to vector<6x128xf32>
    %86 = vector.broadcast %72 : vector<1x128xf32> to vector<6x128xf32>
    %87 = arith.mulf %85, %86 : vector<6x128xf32>
    %88 = vector.shape_cast %87 : vector<6x128xf32> to vector<1x6x128xf32>
    %cst_31 = arith.constant dense<0.000000e+00> : vector<1xf32>
    %89 = vector.multi_reduction <add>, %88, %cst_31 [1, 2] : vector<1x6x128xf32> to vector<1xf32>
    %90 = vector.shape_cast %89 : vector<1xf32> to vector<1x1x1xf32>
    %91 = vector.extract %90[0, 0, 0] : f32 from vector<1x1x1xf32>
    %92 = vector.extract_strided_slice %84 {offsets = [6, 0], sizes = [1, 128], strides = [1, 1]} : vector<8x128xf32> to vector<1x128xf32>
    %93 = arith.mulf %92, %72 : vector<1x128xf32>
    %94 = vector.shape_cast %93 : vector<1x128xf32> to vector<1x1x128xf32>
    %cst_32 = arith.constant dense<0.000000e+00> : vector<1xf32>
    %95 = vector.multi_reduction <add>, %94, %cst_32 [1, 2] : vector<1x1x128xf32> to vector<1xf32>
    %96 = vector.shape_cast %95 : vector<1xf32> to vector<1x1x1xf32>
    %97 = vector.extract %96[0, 0, 0] : f32 from vector<1x1x1xf32>
    %98 = vector.extract_strided_slice %80 {offsets = [0, 0], sizes = [3, 128], strides = [1, 1]} : vector<8x128xf32> to vector<3x128xf32>
    %99 = vector.extract_strided_slice %80 {offsets = [3, 0], sizes = [3, 128], strides = [1, 1]} : vector<8x128xf32> to vector<3x128xf32>
    %cst_33 = arith.constant 5.000000e-01 : f32
    %100 = vector.broadcast %cst_33 : f32 to vector<3x128xf32>
    %101 = arith.mulf %100, %99 : vector<3x128xf32>
    %102 = arith.subf %98, %101 : vector<3x128xf32>
    %103 = vector.extract_strided_slice %80 {offsets = [0, 0], sizes = [3, 128], strides = [1, 1]} : vector<8x128xf32> to vector<3x128xf32>
    %104 = vector.extract_strided_slice %80 {offsets = [3, 0], sizes = [3, 128], strides = [1, 1]} : vector<8x128xf32> to vector<3x128xf32>
    %cst_34 = arith.constant 5.000000e-01 : f32
    %105 = vector.broadcast %cst_34 : f32 to vector<3x128xf32>
    %106 = arith.mulf %105, %104 : vector<3x128xf32>
    %107 = arith.addf %103, %106 : vector<3x128xf32>
    %108 = vector.extract_strided_slice %82 {offsets = [0, 0], sizes = [3, 128], strides = [1, 1]} : vector<8x128xf32> to vector<3x128xf32>
    %109 = vector.extract_strided_slice %82 {offsets = [3, 0], sizes = [3, 128], strides = [1, 1]} : vector<8x128xf32> to vector<3x128xf32>
    %cst_35 = arith.constant 5.000000e-01 : f32
    %110 = vector.broadcast %cst_35 : f32 to vector<3x128xf32>
    %111 = arith.mulf %110, %109 : vector<3x128xf32>
    %112 = arith.subf %108, %111 : vector<3x128xf32>
    %113 = vector.extract_strided_slice %82 {offsets = [0, 0], sizes = [3, 128], strides = [1, 1]} : vector<8x128xf32> to vector<3x128xf32>
    %114 = vector.extract_strided_slice %82 {offsets = [3, 0], sizes = [3, 128], strides = [1, 1]} : vector<8x128xf32> to vector<3x128xf32>
    %cst_36 = arith.constant 5.000000e-01 : f32
    %115 = vector.broadcast %cst_36 : f32 to vector<3x128xf32>
    %116 = arith.mulf %115, %114 : vector<3x128xf32>
    %117 = arith.addf %113, %116 : vector<3x128xf32>
    %118 = arith.subf %107, %102 : vector<3x128xf32>
    %cst_37 = arith.constant 0.000000e+00 : f32
    %119 = vector.broadcast %cst_37 : f32 to vector<3x128xf32>
    %120 = arith.maximumf %118, %119 : vector<3x128xf32>
    %121 = vector.extract_strided_slice %120 {offsets = [0, 0], sizes = [1, 128], strides = [1, 1]} : vector<3x128xf32> to vector<1x128xf32>
    %122 = vector.extract_strided_slice %120 {offsets = [1, 0], sizes = [1, 128], strides = [1, 1]} : vector<3x128xf32> to vector<1x128xf32>
    %123 = arith.mulf %121, %122 : vector<1x128xf32>
    %124 = vector.extract_strided_slice %120 {offsets = [2, 0], sizes = [1, 128], strides = [1, 1]} : vector<3x128xf32> to vector<1x128xf32>
    %125 = arith.mulf %123, %124 : vector<1x128xf32>
    %126 = arith.subf %117, %112 : vector<3x128xf32>
    %cst_38 = arith.constant 0.000000e+00 : f32
    %127 = vector.broadcast %cst_38 : f32 to vector<3x128xf32>
    %128 = arith.maximumf %126, %127 : vector<3x128xf32>
    %129 = vector.extract_strided_slice %128 {offsets = [0, 0], sizes = [1, 128], strides = [1, 1]} : vector<3x128xf32> to vector<1x128xf32>
    %130 = vector.extract_strided_slice %128 {offsets = [1, 0], sizes = [1, 128], strides = [1, 1]} : vector<3x128xf32> to vector<1x128xf32>
    %131 = arith.mulf %129, %130 : vector<1x128xf32>
    %132 = vector.extract_strided_slice %128 {offsets = [2, 0], sizes = [1, 128], strides = [1, 1]} : vector<3x128xf32> to vector<1x128xf32>
    %133 = arith.mulf %131, %132 : vector<1x128xf32>
    %134 = arith.maximumf %102, %112 : vector<3x128xf32>
    %135 = arith.minimumf %107, %117 : vector<3x128xf32>
    %136 = arith.subf %135, %134 : vector<3x128xf32>
    %cst_39 = arith.constant 0.000000e+00 : f32
    %137 = vector.broadcast %cst_39 : f32 to vector<3x128xf32>
    %138 = arith.maximumf %136, %137 : vector<3x128xf32>
    %139 = vector.extract_strided_slice %138 {offsets = [0, 0], sizes = [1, 128], strides = [1, 1]} : vector<3x128xf32> to vector<1x128xf32>
    %140 = vector.extract_strided_slice %138 {offsets = [1, 0], sizes = [1, 128], strides = [1, 1]} : vector<3x128xf32> to vector<1x128xf32>
    %141 = arith.mulf %139, %140 : vector<1x128xf32>
    %142 = vector.extract_strided_slice %138 {offsets = [2, 0], sizes = [1, 128], strides = [1, 1]} : vector<3x128xf32> to vector<1x128xf32>
    %143 = arith.mulf %141, %142 : vector<1x128xf32>
    %144 = arith.addf %125, %133 : vector<1x128xf32>
    %145 = arith.subf %144, %143 : vector<1x128xf32>
    %cst_40 = arith.constant 1.000000e-10 : f32
    %146 = vector.broadcast %cst_40 : f32 to vector<1x128xf32>
    %147 = arith.maximumf %145, %146 : vector<1x128xf32>
    %148 = arith.divf %143, %147 : vector<1x128xf32>
    %149 = arith.minimumf %102, %112 : vector<3x128xf32>
    %150 = arith.maximumf %107, %117 : vector<3x128xf32>
    %151 = arith.subf %150, %149 : vector<3x128xf32>
    %cst_41 = arith.constant 0.000000e+00 : f32
    %152 = vector.broadcast %cst_41 : f32 to vector<3x128xf32>
    %153 = arith.maximumf %151, %152 : vector<3x128xf32>
    %154 = vector.extract_strided_slice %153 {offsets = [0, 0], sizes = [1, 128], strides = [1, 1]} : vector<3x128xf32> to vector<1x128xf32>
    %155 = vector.extract_strided_slice %153 {offsets = [1, 0], sizes = [1, 128], strides = [1, 1]} : vector<3x128xf32> to vector<1x128xf32>
    %156 = arith.mulf %154, %155 : vector<1x128xf32>
    %157 = vector.extract_strided_slice %153 {offsets = [2, 0], sizes = [1, 128], strides = [1, 1]} : vector<3x128xf32> to vector<1x128xf32>
    %158 = arith.mulf %156, %157 : vector<1x128xf32>
    %159 = arith.subf %158, %145 : vector<1x128xf32>
    %cst_42 = arith.constant 1.000000e-10 : f32
    %160 = vector.broadcast %cst_42 : f32 to vector<1x128xf32>
    %161 = arith.maximumf %158, %160 : vector<1x128xf32>
    %162 = arith.divf %159, %161 : vector<1x128xf32>
    %163 = arith.subf %148, %162 : vector<1x128xf32>
    %cst_43 = arith.constant 1.000000e+00 : f32
    %164 = vector.broadcast %cst_43 : f32 to vector<1x128xf32>
    %165 = arith.subf %164, %163 : vector<1x128xf32>
    %166 = arith.mulf %165, %72 : vector<1x128xf32>
    %167 = vector.shape_cast %166 : vector<1x128xf32> to vector<1x1x128xf32>
    %cst_44 = arith.constant dense<0.000000e+00> : vector<1xf32>
    %168 = vector.multi_reduction <add>, %167, %cst_44 [1, 2] : vector<1x1x128xf32> to vector<1xf32>
    %169 = vector.shape_cast %168 : vector<1xf32> to vector<1x1x1xf32>
    %170 = vector.extract %169[0, 0, 0] : f32 from vector<1x1x1xf32>
    %171 = tpu.iota {dimensions = array<i32: 2>} : vector<1x1x128xi32>
    %c0_i32 = arith.constant 0 : i32
    %172 = vector.broadcast %c0_i32 : i32 to vector<1x1x128xi32>
    %173 = arith.cmpi eq, %171, %172 : vector<1x1x128xi32>
    %c1_i32 = arith.constant 1 : i32
    %174 = vector.broadcast %c1_i32 : i32 to vector<1x1x128xi32>
    %175 = arith.cmpi eq, %171, %174 : vector<1x1x128xi32>
    %c2_i32 = arith.constant 2 : i32
    %176 = vector.broadcast %c2_i32 : i32 to vector<1x1x128xi32>
    %177 = arith.cmpi eq, %171, %176 : vector<1x1x128xi32>
    %c3_i32 = arith.constant 3 : i32
    %178 = vector.broadcast %c3_i32 : i32 to vector<1x1x128xi32>
    %179 = arith.cmpi eq, %171, %178 : vector<1x1x128xi32>
    %cst_45 = arith.constant 0.000000e+00 : f32
    %180 = vector.broadcast %97 : f32 to vector<1x1x128xf32>
    %181 = vector.broadcast %cst_45 : f32 to vector<1x1x128xf32>
    %182 = arith.select %179, %180, %181 : vector<1x1x128xi1>, vector<1x1x128xf32>
    %183 = vector.broadcast %170 : f32 to vector<1x1x128xf32>
    %184 = arith.select %177, %183, %182 : vector<1x1x128xi1>, vector<1x1x128xf32>
    %185 = vector.broadcast %91 : f32 to vector<1x1x128xf32>
    %186 = arith.select %175, %185, %184 : vector<1x1x128xi1>, vector<1x1x128xf32>
    %187 = vector.broadcast %78 : f32 to vector<1x1x128xf32>
    %188 = arith.select %173, %187, %186 : vector<1x1x128xi1>, vector<1x1x128xf32>
    %c0_46 = arith.constant 0 : index
    %c0_47 = arith.constant 0 : index
    %c0_48 = arith.constant 0 : index
    %189 = vector.load %arg6[%c0_46, %c0_47, %c0_48] : memref<1x1x128xf32, #tpu.memory_space<vmem>>, vector<1x1x128xf32>
    tpu.vector_store %arg6[%c0_46, %c0_47, %c0_48], %188 {strides = array<i32>} : memref<1x1x128xf32, #tpu.memory_space<vmem>>, vector<1x1x128xf32>,
    return
  }
  func.func @transform_0(%arg0: i32, %arg1: memref<3xi32, #tpu.memory_space<smem>>) -> (i32, i32, i32) {
    %c0_i32 = arith.constant 0 : i32
    %c0_i32_0 = arith.constant 0 : i32
    %c0_i32_1 = arith.constant 0 : i32
    return %arg0, %c0_i32, %c0_i32_0 : i32, i32, i32
  }
  func.func @transform_1(%arg0: i32, %arg1: memref<3xi32, #tpu.memory_space<smem>>) -> (i32, i32, i32) {
    %c0_i32 = arith.constant 0 : i32
    %c0_i32_0 = arith.constant 0 : i32
    %c0_i32_1 = arith.constant 0 : i32
    return %arg0, %c0_i32, %c0_i32_0 : i32, i32, i32
  }
  func.func @transform_2(%arg0: i32, %arg1: memref<3xi32, #tpu.memory_space<smem>>) -> (i32, i32, i32) {
    %c0_i32 = arith.constant 0 : i32
    %c0_i32_0 = arith.constant 0 : i32
    %c0_i32_1 = arith.constant 0 : i32
    return %arg0, %c0_i32, %c0_i32_0 : i32, i32, i32
  }
  func.func @transform_3(%arg0: i32, %arg1: memref<3xi32, #tpu.memory_space<smem>>) -> (i32, i32, i32) {
    %c0_i32 = arith.constant 0 : i32
    %c0_i32_0 = arith.constant 0 : i32
    %c0_i32_1 = arith.constant 0 : i32
    return %arg0, %c0_i32, %c0_i32_0 : i32, i32, i32
  }
  func.func @transform_4(%arg0: i32, %arg1: memref<3xi32, #tpu.memory_space<smem>>) -> (i32, i32, i32) {
    %c0_i32 = arith.constant 0 : i32
    %c0_i32_0 = arith.constant 0 : i32
    %c0_i32_1 = arith.constant 0 : i32
    return %arg0, %c0_i32, %c0_i32_0 : i32, i32, i32
  }
}

</mosaic_0001>

<llo_original>
// kernel: tpu_custom_call.1
$region0: #{tpu_custom_call.1}
  #allocation0 [shape = 'u32[]', space=smem, size = 0x4, offset = 0x4, fixed_abs, tag = 'smem constant byte address 0x4 - core index']
  #allocation1 [shape = 'u32[144,128]{1,0:T(1,128)}', space=vmem, size = 0x12000, scoped, tag = 'internal scratch']
  #allocation2 [shape = 's32[1]{0}', space=sflag, size = 0x4, scoped, tag = 'scoped memory for tpu_custom_call.1']
  #allocation3 [shape = 'u8[512]{0}', space=smem, size = 0x200, scoped, tag = 'prefetched SMEM operand 0']
  %s0 = inlined_call_operand.vmem [shape: s32[3], index: 0, kind: input, shape index: {}]
  %s1 = inlined_call_operand.vmem [shape: f32[3,16,3], index: 1, kind: input, shape index: {}]
  %s2 = inlined_call_operand.vmem [shape: f32[3,1,128], index: 2, kind: input, shape index: {}]
  %s3 = inlined_call_operand.vmem [shape: f32[3,8,128], index: 3, kind: input, shape index: {}]
  %s4 = inlined_call_operand.vmem [shape: f32[3,8,128], index: 4, kind: input, shape index: {}]
  %s5 = inlined_call_operand.hbm [shape: f32[3,1,128], index: 5, kind: output, shape index: {}]
  %s6 = sld [smem:[#allocation0]]
  $region49: #{tpu_custom_call.1} parent=0
    _
  %s8 = ssub.s32 1, %s6
  %s9 = scalar_select 0, %s8, %s6
  %s10 = sshll.u32 %s0, 4
  %s11 = int_to_ptr.vmem [resolvable:$true] %s10
  %13 = dma.vmem_to_smem %s11, 16, [#allocation3], [#allocation2]
  %14 = dma.done [#allocation2], 16
  %15 = sfence
  $region1: #{tpu_custom_call.1} parent=0
    #allocation4 [shape = 'u8[1024]{0}', space=vmem, size = 0x400, scoped, tag = 'output window, operand 0']
    #allocation5 [shape = 's32[2]{0}', space=sflag, size = 0x8, scoped, tag = 'scoped memory for tpu_custom_call.1']
    %16 = vsyncpa [#allocation5], 0
    %s17 = scalar_lea.sflag [#allocation5], 1
    %18 = vsyncpa %s17, 0
    loop: start=0, step=1, limit=5
    $region2: #{tpu_custom_call.1} parent=1 // loop_pre_header
      _
    $region3: #{tpu_custom_call.1} parent=1 // loop_header
      %s20 = sphi 0, %s24
      %p21 = scmp.ge.s32.totalorder %s20, 5
      %s30 = sphi 0, %s32
      %s33 = sphi 0, %s30
      %s34 = sphi 0, %s33
      %s50 = sphi 0, %s34
      %s56 = sphi 0, %s58
      %s59 = sphi 0, %s56
      %s60 = sphi 0, %s59
      %s76 = sphi 0, %s60
      %s82 = sphi 0, %s84
      %s85 = sphi 0, %s82
      %s86 = sphi 0, %s85
      %s102 = sphi 0, %s86
      %s108 = sphi 0, %s110
      %s111 = sphi 0, %s108
      %s112 = sphi 0, %s111
      %s128 = sphi 0, %s112
      %s134 = sphi 0, %s136
      %s137 = sphi 0, %s134
      %s138 = sphi 0, %s137
      %s154 = sphi 0, %s138
    $region4: #{tpu_custom_call.1} parent=1 // loop_header_branch
      %23 = sbr.rel (%p21) target = $region8
    $region5: #{tpu_custom_call.1} parent=1 // loop_body
      %s25 = ssub.s32 %s20, 1
      %s26 = ssub.s32 %s20, 2
      %s27 = sadd.s32 %s20, 1
      %s28 = ssub.s32 %s20, %s27
      %p29 = scmp.eq.s32.totalorder %s28, 0
      %s31 = sadd.s32 %s30, 1
      %s32 = scalar_select %p29, %s30, %s31
      %p35 = pneg %p29
      %p36 = scmp.eq.s32.totalorder %s20, 2
      %p37 = por %p35, %p36
      %p38 = scmp.ne.s32.totalorder %s30, %s33
      %p39 = scmp.eq.s32.totalorder %s20, 0
      %p40 = por %p38, %p39
      %p41 = scmp.ne.s32.totalorder %s30, %s33
      %p42 = scmp.eq.s32.totalorder %s25, 2
      %p43 = por %p41, %p42
      %p44 = scmp.ne.s32.totalorder %s33, %s34
      %p45 = scmp.eq.s32.totalorder %s25, 0
      %p46 = por %p44, %p45
      %p47 = scmp.ne.s32.totalorder %s33, %s34
      %p48 = scmp.eq.s32.totalorder %s26, 2
      %p49 = por %p47, %p48
      %p51 = scmp.ne.s32.totalorder %s34, %s50
      %p52 = scmp.eq.s32.totalorder %s26, 0
      %p53 = por %p51, %p52
      %s54 = ssub.s32 %s20, %s27
      %p55 = scmp.eq.s32.totalorder %s54, 0
      %s57 = sadd.s32 %s56, 1
      %s58 = scalar_select %p55, %s56, %s57
      %p61 = pneg %p55
      %p62 = scmp.eq.s32.totalorder %s20, 2
      %p63 = por %p61, %p62
      %p64 = scmp.ne.s32.totalorder %s56, %s59
      %p65 = scmp.eq.s32.totalorder %s20, 0
      %p66 = por %p64, %p65
      %p67 = scmp.ne.s32.totalorder %s56, %s59
      %p68 = scmp.eq.s32.totalorder %s25, 2
      %p69 = por %p67, %p68
      %p70 = scmp.ne.s32.totalorder %s59, %s60
      %p71 = scmp.eq.s32.totalorder %s25, 0
      %p72 = por %p70, %p71
      %p73 = scmp.ne.s32.totalorder %s59, %s60
      %p74 = scmp.eq.s32.totalorder %s26, 2
      %p75 = por %p73, %p74
      %p77 = scmp.ne.s32.totalorder %s60, %s76
      %p78 = scmp.eq.s32.totalorder %s26, 0
      %p79 = por %p77, %p78
      %s80 = ssub.s32 %s20, %s27
      %p81 = scmp.eq.s32.totalorder %s80, 0
      %s83 = sadd.s32 %s82, 1
      %s84 = scalar_select %p81, %s82, %s83
      %p87 = pneg %p81
      %p88 = scmp.eq.s32.totalorder %s20, 2
      %p89 = por %p87, %p88
      %p90 = scmp.ne.s32.totalorder %s82, %s85
      %p91 = scmp.eq.s32.totalorder %s20, 0
      %p92 = por %p90, %p91
      %p93 = scmp.ne.s32.totalorder %s82, %s85
      %p94 = scmp.eq.s32.totalorder %s25, 2
      %p95 = por %p93, %p94
      %p96 = scmp.ne.s32.totalorder %s85, %s86
      %p97 = scmp.eq.s32.totalorder %s25, 0
      %p98 = por %p96, %p97
      %p99 = scmp.ne.s32.totalorder %s85, %s86
      %p100 = scmp.eq.s32.totalorder %s26, 2
      %p101 = por %p99, %p100
      %p103 = scmp.ne.s32.totalorder %s86, %s102
      %p104 = scmp.eq.s32.totalorder %s26, 0
      %p105 = por %p103, %p104
      %s106 = ssub.s32 %s20, %s27
      %p107 = scmp.eq.s32.totalorder %s106, 0
      %s109 = sadd.s32 %s108, 1
      %s110 = scalar_select %p107, %s108, %s109
      %p113 = pneg %p107
      %p114 = scmp.eq.s32.totalorder %s20, 2
      %p115 = por %p113, %p114
      %p116 = scmp.ne.s32.totalorder %s108, %s111
      %p117 = scmp.eq.s32.totalorder %s20, 0
      %p118 = por %p116, %p117
      %p119 = scmp.ne.s32.totalorder %s108, %s111
      %p120 = scmp.eq.s32.totalorder %s25, 2
      %p121 = por %p119, %p120
      %p122 = scmp.ne.s32.totalorder %s111, %s112
      %p123 = scmp.eq.s32.totalorder %s25, 0
      %p124 = por %p122, %p123
      %p125 = scmp.ne.s32.totalorder %s111, %s112
      %p126 = scmp.eq.s32.totalorder %s26, 2
      %p127 = por %p125, %p126
      %p129 = scmp.ne.s32.totalorder %s112, %s128
      %p130 = scmp.eq.s32.totalorder %s26, 0
      %p131 = por %p129, %p130
      %s132 = ssub.s32 %s20, %s27
      %p133 = scmp.eq.s32.totalorder %s132, 0
      %s135 = sadd.s32 %s134, 1
      %s136 = scalar_select %p133, %s134, %s135
      %p139 = pneg %p133
      %p140 = scmp.eq.s32.totalorder %s20, 2
      %p141 = por %p139, %p140
      %p142 = scmp.ne.s32.totalorder %s134, %s137
      %p143 = scmp.eq.s32.totalorder %s20, 0
      %p144 = por %p142, %p143
      %p145 = scmp.ne.s32.totalorder %s134, %s137
      %p146 = scmp.eq.s32.totalorder %s25, 2
      %p147 = por %p145, %p146
      %p148 = scmp.ne.s32.totalorder %s137, %s138
      %p149 = scmp.eq.s32.totalorder %s25, 0
      %p150 = por %p148, %p149
      %p151 = scmp.ne.s32.totalorder %s137, %s138
      %p152 = scmp.eq.s32.totalorder %s26, 2
      %p153 = por %p151, %p152
      %p155 = scmp.ne.s32.totalorder %s138, %s154
      %p156 = scmp.eq.s32.totalorder %s26, 0
      %p157 = por %p155, %p156
      %p158 = scmp.le.s32.totalorder 1, %s20
      %p159 = scmp.lt.s32.totalorder %s20, 4
      %p160 = pnand %p158, %p159
      %p161 = pneg %p160
      // Predicated region
      $region9: #{tpu_custom_call.1} parent=5 // pred_check
        _
      $region10: #{tpu_custom_call.1} parent=5 // pred_check_branch
        %163 = sbr.rel (%p160) target = $region12
      $region11: #{tpu_custom_call.1} parent=5 // pred_region
        %s164 = ssub.s32 %s20, 1
      $region12: #{tpu_custom_call.1} parent=5 // pred_fallthru
        _
      %p165 = scmp.lt.s32.totalorder %s20, 3
      // Predicated region
      $region13: #{tpu_custom_call.1} parent=5 // pred_check
        %p166 = pneg %p165
      $region14: #{tpu_custom_call.1} parent=5 // pred_check_branch
        %168 = sbr.rel (%p166) target = $region16
      $region15: #{tpu_custom_call.1} parent=5 // pred_region
        // Predicated region
        $region17: #{tpu_custom_call.1} parent=15 // pred_check
          %p169 = pneg %p40
        $region18: #{tpu_custom_call.1} parent=15 // pred_check_branch
          %171 = sbr.rel (%p169) target = $region20
        $region19: #{tpu_custom_call.1} parent=15 // pred_region
          %p172 = scmp.lt.s32.totalorder %s20, 2
          %s173 = scalar_select %p172, %s20, 2
          %s174 = smul.addr %s173, 2
          %s175 = smul.addr %s174, 8
          %s176 = scalar_lea.vmem %s1, %s175
        $region20: #{tpu_custom_call.1} parent=15 // pred_fallthru
          _
        // Predicated region
        $region21: #{tpu_custom_call.1} parent=15 // pred_check
          %p177 = pneg %p66
        $region22: #{tpu_custom_call.1} parent=15 // pred_check_branch
          %179 = sbr.rel (%p177) target = $region24
        $region23: #{tpu_custom_call.1} parent=15 // pred_region
          %p180 = scmp.lt.s32.totalorder %s20, 2
          %s181 = scalar_select %p180, %s20, 2
          %s182 = scalar_lea.vmem %s2, %s181
        $region24: #{tpu_custom_call.1} parent=15 // pred_fallthru
          _
        // Predicated region
        $region25: #{tpu_custom_call.1} parent=15 // pred_check
          %p183 = pneg %p92
        $region26: #{tpu_custom_call.1} parent=15 // pred_check_branch
          %185 = sbr.rel (%p183) target = $region28
        $region27: #{tpu_custom_call.1} parent=15 // pred_region
          %p186 = scmp.lt.s32.totalorder %s20, 2
          %s187 = scalar_select %p186, %s20, 2
          %s188 = smul.addr %s187, 8
          %s189 = scalar_lea.vmem %s3, %s188
        $region28: #{tpu_custom_call.1} parent=15 // pred_fallthru
          _
        // Predicated region
        $region29: #{tpu_custom_call.1} parent=15 // pred_check
          %p190 = pneg %p118
        $region30: #{tpu_custom_call.1} parent=15 // pred_check_branch
          %192 = sbr.rel (%p190) target = $region32
        $region31: #{tpu_custom_call.1} parent=15 // pred_region
          %p193 = scmp.lt.s32.totalorder %s20, 2
          %s194 = scalar_select %p193, %s20, 2
          %s195 = smul.addr %s194, 8
          %s196 = scalar_lea.vmem %s4, %s195
        $region32: #{tpu_custom_call.1} parent=15 // pred_fallthru
          _
      $region16: #{tpu_custom_call.1} parent=5 // pred_fallthru
        _
      %p197 = scmp.le.s32.totalorder 1, %s20
      %p198 = scmp.lt.s32.totalorder %s20, 4
      %p199 = pnand %p197, %p198
      %p200 = pneg %p199
      // Predicated region
      $region33: #{tpu_custom_call.1} parent=5 // pred_check
        _
      $region34: #{tpu_custom_call.1} parent=5 // pred_check_branch
        %202 = sbr.rel (%p199) target = $region36
      $region35: #{tpu_custom_call.1} parent=5 // pred_region
        %s203 = ssub.s32 %s20, 1
        %p204 = scmp.lt.s32.totalorder %s25, 2
        %s205 = scalar_select %p204, %s25, 2
        %s206 = smul.addr %s205, 2
        %s207 = smul.addr %s206, 8
        %s208 = scalar_lea.vmem %s1, %s207
        %p209 = pneg %p46
        %p210 = pneg %p43
        %p211 = scmp.lt.s32.totalorder %s25, 2
        %s212 = scalar_select %p211, %s25, 2
        %s213 = scalar_lea.vmem %s2, %s212
        %p214 = pneg %p72
        %p215 = pneg %p69
        %p216 = scmp.lt.s32.totalorder %s25, 2
        %s217 = scalar_select %p216, %s25, 2
        %s218 = smul.addr %s217, 8
        %s219 = scalar_lea.vmem %s3, %s218
        %p220 = pneg %p98
        %p221 = pneg %p95
        %p222 = scmp.lt.s32.totalorder %s25, 2
        %s223 = scalar_select %p222, %s25, 2
        %s224 = smul.addr %s223, 8
        %s225 = scalar_lea.vmem %s4, %s224
        %p226 = pneg %p124
        %p227 = pneg %p121
        %p228 = pneg %p150
        %p229 = pneg %p147
        %s230 = sand.u32 %s137, 1
        %s231 = scalar_lea.sflag [#allocation5], %s230
        %s232 = sand.u32 %s137, 1
        %s233 = scalar_lea.vmem [#allocation4], %s232
        %p234 = scmp.lt.s32.totalorder %s25, 2
        %s235 = scalar_select %p234, %s25, 2
        %s236 = smul.addr %s235, 2
        %s237 = smul.addr %s236, 8
        %s238 = scalar_lea.vmem %s1, %s237
        %p239 = scmp.lt.s32.totalorder %s25, 2
        %s240 = scalar_select %p239, %s25, 2
        %s241 = scalar_lea.vmem %s2, %s240
        %p242 = scmp.lt.s32.totalorder %s25, 2
        %s243 = scalar_select %p242, %s25, 2
        %s244 = smul.addr %s243, 8
        %s245 = scalar_lea.vmem %s3, %s244
        %p246 = scmp.lt.s32.totalorder %s25, 2
        %s247 = scalar_select %p246, %s25, 2
        %s248 = smul.addr %s247, 8
        %s249 = scalar_lea.vmem %s4, %s248
        %s250 = sld [smem:[#allocation3 + %s25]]
        %v251 = vld [vmem:[%s238] sm:$0xff]
        %v252 = vld [vmem:[%s238 + $0x8] sm:$0xff]
        %v253 = vand.u32 2147483647, %v251
        %v254 = vand.u32 2147483647, %v252
        %v255 = vsub.f32 0.0, %v253
        %v256 = vsub.f32 0.0, %v254
        %v257 = vmul.f32 %v255, 1.442695
        %v258 = vpow.pop %v257
        %v259 = vmul.f32 %v256, 1.442695
        %v260 = vpow.pop %v259
        %v261 = vadd.f32 %v258, 1.0
        %v262 = vadd.f32 %v260, 1.0
        %v263 = vlog2.pop %v261
        %v264 = vmul.f32 %v263, 0.6931472
        %v265 = vlog2.pop %v262
        %v266 = vmul.f32 %v265, 0.6931472
        %v267 = vmax.f32 %v251, 0.0
        %v268 = vmax.f32 %v252, 0.0
        %v269 = vadd.f32 %v267, %v264
        %v270 = vadd.f32 %v268, %v266
        %vm271 = vcmp.ge.f32.partialorder %v251, 0.0
        %vm272 = vcmp.ge.f32.partialorder %v252, 0.0
        %v273 = vsel %vm271, 1.0, %v258
        %v274 = vsel %vm272, 1.0, %v260
        %v275 = vrcp.pop %v261
        %v276 = vrcp.pop %v262
        %v277 = vmul.f32 %v273, %v275
        %v278 = vmul.f32 %v274, %v276
        %v279 = vmul.f32 %v277, %v277
        %v280 = vmul.f32 %v278, %v278
        %v281 = vmul.f32 %v279, 0.75
        %v282 = vmul.f32 %v280, 0.75
        %v283 = vmul.f32 %v281, %v269
        %v284 = vmul.f32 %v282, %v270
        %vm285 = vcmask 23552
        %v286 = vsel %vm285, %v283, 0.0
        %v287 = vsel %vm285, %v284, 0.0
        %v288 = vadd.f32 %v286, %v287
        %289 = vadd.xlane.f32.xlu0 %v288
        %v290 = vpop.xlane.xlu0 %289
        %v291 = vrot.slane %v290, 4
        %v292 = vadd.f32 %v290, %v291
        %v293 = vrot.slane %v292, 2
        %v294 = vadd.f32 %v292, %v293
        %v295 = vrot.slane %v294, 1
        %v296 = vadd.f32 %v294, %v295
        %s297 = vtos %v296
        %v298 = vld [vmem:[%s241] sm:$0x1]
        %v299 = vand.u32 2147483647, %v298
        %v300 = vsub.f32 0.0, %v299
        %v301 = vmul.f32 %v300, 1.442695
        %v302 = vpow.pop %v301
        %v303 = vadd.f32 %v302, 1.0
        %v304 = vlog2.pop %v303
        %v305 = vmul.f32 %v304, 0.6931472
        %v306 = vmax.f32 %v298, 0.0
        %v307 = vadd.f32 %v306, %v305
        %v308 = vsub.f32 0.0, %v298
        %v309 = vmax.f32 %v308, 0.0
        %v310 = vadd.f32 %v309, %v305
        %vm311 = vcmp.ge.f32.partialorder %v298, 0.0
        %v312 = vsel %vm311, 1.0, %v302
        %v313 = vrcp.pop %v303
        %v314 = vmul.f32 %v312, %v313
        %v315 = vsub.f32 1.0, %v314
        %v316 = vmul.f32 %v315, %v315
        %v317 = vmul.f32 %v314, %v314
        %v318 = vmul.f32 %v316, 0.25
        %v319 = vmul.f32 %v318, %v310
        %v320 = vmul.f32 %v317, 0.75
        %v321 = vmul.f32 %v320, %v307
        %v322 = vsub.f32 %v319, %v321
        %v323 = vlaneseq
        %v324 = vand.u32 %v323, 127
        %v325 = vstv %s250
        %vm326 = vcmp.lt.s32.totalorder %v324, %v325
        %v327 = vsel %vm326, 1, 0
        %v328 = vcvt.s32.f32 %v327
        %v329 = vmul.f32 %v322, %v328
        %vm330 = vcmask 1040384
        %v331 = vsel %vm330, %v329, 0.0
        %332 = vadd.xlane.f32.xlu0 %v331
        %v333 = vpop.xlane.xlu0 %332
        %v334 = vrot.slane %v333, 4
        %v335 = vadd.f32 %v333, %v334
        %v336 = vrot.slane %v335, 2
        %v337 = vadd.f32 %v335, %v336
        %v338 = vrot.slane %v337, 1
        %v339 = vadd.f32 %v337, %v338
        %s340 = vtos %v339
        %s341 = sadd.f32 %s297, %s340
        %v342 = vld [vmem:[%s245] sm:$0xff]
        %v343 = vld [vmem:[%s249] sm:$0xff]
        %v344 = vsub.f32 %v342, %v343
        %v345 = vand.u32 2147483647, %v344
        %v346 = vmul.f32 %v345, %v328
        %vm347 = vcmask 1045504
        %v348 = vsel %vm347, %v346, 0.0
        %349 = vadd.xlane.f32.xlu0 %v348
        %v350 = vpop.xlane.xlu0 %349
        %v351 = vrot.slane %v350, 4
        %v352 = vadd.f32 %v350, %v351
        %v353 = vrot.slane %v352, 2
        %v354 = vadd.f32 %v352, %v353
        %v355 = vrot.slane %v354, 1
        %v356 = vadd.f32 %v354, %v355
        %s357 = vtos %v356
        %v359 = vrot.slane %v346, 6
        %v361 = vsel %vm330, %v359, 0.0
        %362 = vadd.xlane.f32.xlu0 %v361
        %v363 = vpop.xlane.xlu0 %362
        %v364 = vrot.slane %v363, 4
        %v365 = vadd.f32 %v363, %v364
        %v366 = vrot.slane %v365, 2
        %v367 = vadd.f32 %v365, %v366
        %v368 = vrot.slane %v367, 1
        %v369 = vadd.f32 %v367, %v368
        %s370 = vtos %v369
        %v371 = vmul.f32 %v342, 0.5
        %v373 = vrot.slane %v371, 3
        %v375 = vsub.f32 %v342, %v373
        %v376 = vadd.f32 %v342, %v373
        %v377 = vmul.f32 %v343, 0.5
        %v379 = vrot.slane %v377, 3
        %v381 = vsub.f32 %v343, %v379
        %v382 = vadd.f32 %v343, %v379
        %v383 = vsub.f32 %v376, %v375
        %v384 = vmax.f32 %v383, 0.0
        %v386 = vrot.slane %v384, 1
        %v388 = vmul.f32 %v384, %v386
        %v389 = vrot.slane %v384, 2
        %v391 = vmul.f32 %v388, %v389
        %v392 = vsub.f32 %v382, %v381
        %v393 = vmax.f32 %v392, 0.0
        %v395 = vrot.slane %v393, 1
        %v397 = vmul.f32 %v393, %v395
        %v398 = vrot.slane %v393, 2
        %v400 = vmul.f32 %v397, %v398
        %v401 = vmax.f32 %v375, %v381
        %v402 = vmin.f32 %v376, %v382
        %v403 = vsub.f32 %v402, %v401
        %v404 = vmax.f32 %v403, 0.0
        %v406 = vrot.slane %v404, 1
        %v408 = vmul.f32 %v404, %v406
        %v409 = vrot.slane %v404, 2
        %v411 = vmul.f32 %v408, %v409
        %v412 = vadd.f32 %v391, %v400
        %v413 = vsub.f32 %v412, %v411
        %v414 = vmax.f32 %v413, 1e-10
        %v415 = vrcp.pop %v414
        %v416 = vmul.f32 %v411, %v415
        %v417 = vmin.f32 %v375, %v381
        %v418 = vmax.f32 %v376, %v382
        %v419 = vsub.f32 %v418, %v417
        %v420 = vmax.f32 %v419, 0.0
        %v422 = vrot.slane %v420, 1
        %v424 = vmul.f32 %v420, %v422
        %v425 = vrot.slane %v420, 2
        %v427 = vmul.f32 %v424, %v425
        %v428 = vsub.f32 %v427, %v413
        %v429 = vmax.f32 %v427, 1e-10
        %v430 = vrcp.pop %v429
        %v431 = vmul.f32 %v428, %v430
        %v432 = vsub.f32 %v416, %v431
        %v433 = vsub.f32 1.0, %v432
        %v434 = vmul.f32 %v433, %v328
        %v435 = vsel %vm330, %v434, 0.0
        %436 = vadd.xlane.f32.xlu0 %v435
        %v437 = vpop.xlane.xlu0 %436
        %v438 = vrot.slane %v437, 4
        %v439 = vadd.f32 %v437, %v438
        %v440 = vrot.slane %v439, 2
        %v441 = vadd.f32 %v439, %v440
        %v442 = vrot.slane %v441, 1
        %v443 = vadd.f32 %v441, %v442
        %s444 = vtos %v443
        %vm445 = vcmp.eq.s32.totalorder %v324, 0
        %vm446 = vcmp.eq.s32.totalorder %v324, 1
        %vm447 = vcmp.eq.s32.totalorder %v324, 2
        %vm448 = vcmp.eq.s32.totalorder %v324, 3
        %v449 = vstv %s370
        %v450 = vsel %vm448, %v449, 0.0
        %v451 = vstv %s444
        %v452 = vsel %vm447, %v451, %v450
        %v453 = vstv %s357
        %v454 = vsel %vm446, %v453, %v452
        %v455 = vstv %s341
        %v456 = vsel %vm445, %v455, %v454
        %457 = vst [vmem:[%s233] sm:$0x1] %v456
        %s458 = sand.u32 %s137, 1
        %s459 = scalar_lea.sflag [#allocation5], %s458
        %s460 = sand.u32 %s137, 1
        %s461 = scalar_lea.vmem [#allocation4], %s460
        // Predicated region
        $region37: #{tpu_custom_call.1} parent=35 // pred_check
          %p462 = pneg %p147
        $region38: #{tpu_custom_call.1} parent=35 // pred_check_branch
          %464 = sbr.rel (%p462) target = $region40
        $region39: #{tpu_custom_call.1} parent=35 // pred_region
          %s466 = ssub.s32 16, 16
          %467 = vsyncadd %s459, %s466
          %s468 = smul.addr %s25, 16
          %s469 = scalar_lea.hbm %s5, %s468
          %s471 = sshll.u32 %s461, 4
          %s472 = int_to_ptr.vmem [resolvable:$true] %s471
          %474 = dma.vmem_to_hbm [thread:$0]  %s472, 16, %s469, %s459
        $region40: #{tpu_custom_call.1} parent=35 // pred_fallthru
          _
      $region36: #{tpu_custom_call.1} parent=5 // pred_fallthru
        _
      %p475 = scmp.le.s32.totalorder 2, %s20
      // Predicated region
      $region41: #{tpu_custom_call.1} parent=5 // pred_check
        %p476 = pneg %p475
      $region42: #{tpu_custom_call.1} parent=5 // pred_check_branch
        %478 = sbr.rel (%p476) target = $region44
      $region43: #{tpu_custom_call.1} parent=5 // pred_region
        %s479 = ssub.s32 %s20, 2
        // Predicated region
        $region45: #{tpu_custom_call.1} parent=43 // pred_check
          %p480 = pneg %p153
        $region46: #{tpu_custom_call.1} parent=43 // pred_check_branch
          %482 = sbr.rel (%p480) target = $region48
        $region47: #{tpu_custom_call.1} parent=43 // pred_region
          %s483 = sand.u32 %s138, 1
          %s484 = scalar_lea.sflag [#allocation5], %s483
          %s485 = sand.u32 %s138, 1
          %s486 = scalar_lea.vmem [#allocation4], %s485
          %487 = dma.done %s484, 16
        $region48: #{tpu_custom_call.1} parent=43 // pred_fallthru
          _
      $region44: #{tpu_custom_call.1} parent=5 // pred_fallthru
        _
    $region6: #{tpu_custom_call.1} parent=1 // loop_footer
      %s24 = sadd.s32 1, %s20
    $region7: #{tpu_custom_call.1} parent=1 // loop_footer_branch
      %19 = sbr.rel target = $region3
    $region8: #{tpu_custom_call.1} parent=1 // loop_exit
      _
    %488 = vsyncpa [#allocation5], 1
    %s489 = scalar_lea.sflag [#allocation5], 1
    %490 = vsyncpa %s489, 1

</llo_original>
